<compile_context>
chip_gen: v7x
topology: tpu7x:2x2x1
jax: 0.10.0
libtpu: 0.0.40
codegen_flags: <defaults>
</compile_context>

<pallas_src>
import functools

import jax
import jax.numpy as jnp
from jax.experimental import pallas as pl
from jax.experimental.pallas import tpu as pltpu


_LANE_MAJOR_MAX_C = 32   # classes <= this -> put samples on the lane axis


def _round_up(x, m):
    return ((x + m - 1) // m) * m


def _vmem_budget_bytes():
    """Streaming working-set budget, sized per TPU generation.

    v7x has 64 MiB physical VMEM (32 MiB scoped default) vs 128 MiB on v5e/v6e;
    keep the budget within the default scoped limits so no vmem_limit_bytes bump
    is needed for typical shapes.
    """
    try:
        cap = pltpu.get_tpu_info().vmem_capacity_bytes
    except Exception:        # conservative fallback if the query is unavailable
        cap = 64 << 20
    return int(max(4 << 20, min(cap // 8, 12 << 20)))


def _per_sample_vmem_bytes(c, itemsize):
    # double-buffered logits stream + double-buffered int32 targets
    # + in-kernel f32 temporaries (f32 cast of x, exp(x-m), one-hot compare/select)
    # + a handful of per-sample (...,1)/(1,...) f32 vectors.
    return 2 * c * max(itemsize, 1) + 2 * 4 + 3 * c * 4 + 8 * 4


def _samples_per_tile(n, c, itemsize, budget_bytes, cap):
    s = budget_bytes // _per_sample_vmem_bytes(c, itemsize)
    s = int(min(s, cap, _round_up(n, 128)))
    if s >= 128:
        s = (s // 128) * 128      # multiple of 128 -> lane-dense 'none' stores
    else:
        s = max(8, (s // 8) * 8)  # huge-C fallback: sublane granularity
    return s


def _compiler_params(semantics, est_vmem_bytes):
    kwargs = dict(dimension_semantics=semantics)
    if est_vmem_bytes > (12 << 20):
        # Tiles larger than the v5e 16 MiB scoped default: raise the limit,
        # clamped safely below v7x's 64 MiB physical VMEM.
        kwargs["vmem_limit_bytes"] = int(min(est_vmem_bytes + (8 << 20), 56 << 20))
    return pltpu.CompilerParams(**kwargs)


# ---------------------------------------------------------------------------
# Per-tile math (shared between layouts)
# ---------------------------------------------------------------------------

def _focal_from_tile(x, t, class_iota, *, axis, alpha, gamma):
    """Per-sample focal values for one tile; classes along `axis`.

    x: logits tile in native dtype; t: int32 targets broadcastable against x
    along the non-class axis; class_iota: int32 class indices broadcastable
    against t.  Returns f32 per-sample values with a size-1 class axis.
    """
    if x.dtype == jnp.bfloat16:
        # v6e/v7x: native bf16 VPU/EUP -> bf16 exp over the (tile x C) softmax
        # body (2x EUP throughput, half the vreg footprint), f32 class-sum.
        # TODO(synk): v5e has no bf16 VPU/EUP; pass f32 logits there.
        m = jnp.max(x, axis=axis, keepdims=True)
        s = jnp.sum(jnp.exp(x - m).astype(jnp.float32), axis=axis, keepdims=True)
        lse = m.astype(jnp.float32) + jnp.log(s)
        tgt = jnp.sum(jnp.where(class_iota == t, x, jnp.zeros((), x.dtype)),
                      axis=axis, keepdims=True).astype(jnp.float32)
    else:
        xf = x.astype(jnp.float32)       # cast on load; wrapper keeps native dtype
        m = jnp.max(xf, axis=axis, keepdims=True)
        lse = m + jnp.log(jnp.sum(jnp.exp(xf - m), axis=axis, keepdims=True))
        # Target logit via one-hot select + reduce over the class axis.
        # TODO(synk): no ignore_index / out-of-range-target handling (matches the
        # module's usage: targets are always valid class indices).
        tgt = jnp.sum(jnp.where(class_iota == t, xf, 0.0), axis=axis, keepdims=True)

    ce = jnp.maximum(lse - tgt, 0.0)     # clamp rounding (lse >= target logit)
    pt = jnp.exp(-ce)
    u = jnp.maximum(1.0 - pt, 0.0)

    g = float(gamma)
    if g == int(g) and g >= 0:
        w = jax.lax.integer_pow(u, int(g))   # VPU multiplies (gamma=2 -> u*u)
    else:
        w = u ** g                           # fractional gamma: pow (EUP)
    return alpha * w * ce


def _rm_tile_focal(x_ref, t_ref, alpha, gamma):
    """Row-major tile: samples on sublanes, classes on lanes. Returns (blk, 1) f32."""
    x = x_ref[...]                                                   # (blk, C)
    t = t_ref[...]                                                   # (blk, 1) int32
    col = jax.lax.broadcasted_iota(jnp.int32, (1, x.shape[1]), 1)    # (1, C)
    return _focal_from_tile(x, t, col, axis=1, alpha=alpha, gamma=gamma)


def _cm_tile_focal(x_ref, t_ref, alpha, gamma):
    """Lane-major tile: classes on sublanes, samples on lanes. Returns (1, blk) f32."""
    x = x_ref[...]                                                   # (C, blk)
    t = t_ref[...]                                                   # (1, blk) int32
    row = jax.lax.broadcasted_iota(jnp.int32, (x.shape[0], 1), 0)    # (C, 1)
    return _focal_from_tile(x, t, row, axis=0, alpha=alpha, gamma=gamma)


# ---------------------------------------------------------------------------
# Kernels
# ---------------------------------------------------------------------------

def _rm_sum_kernel(x_ref, t_ref, o_ref, acc_ref, *, alpha, gamma, n_valid, block):
    i = pl.program_id(0)

    @pl.when(i == 0)
    def _():
        acc_ref[...] = jnp.zeros_like(acc_ref)

    focal = _rm_tile_focal(x_ref, t_ref, alpha, gamma)               # (blk, 1)
    # Mask rows of the partial last tile (select, NOT multiply: out-of-bounds
    # rows may contain NaN garbage from the un-padded read).
    r = jax.lax.broadcasted_iota(jnp.int32, focal.shape, 0) + i * block
    focal = jnp.where(r < n_valid, focal, 0.0)
    acc_ref[...] += jnp.sum(focal, keepdims=True)                    # (1, 1)

    @pl.when(i == pl.num_programs(0) - 1)
    def _():
        o_ref[...] = acc_ref[...]


def _cm_sum_kernel(x_ref, t_ref, o_ref, acc_ref, *, alpha, gamma, n_valid, block):
    i = pl.program_id(0)

    @pl.when(i == 0)
    def _():
        acc_ref[...] = jnp.zeros_like(acc_ref)

    focal = _cm_tile_focal(x_ref, t_ref, alpha, gamma)               # (1, blk)
    c = jax.lax.broadcasted_iota(jnp.int32, focal.shape, 1) + i * block
    focal = jnp.where(c < n_valid, focal, 0.0)                       # select mask
    acc_ref[...] += jnp.sum(focal, keepdims=True)                    # (1, 1)

    @pl.when(i == pl.num_programs(0) - 1)
    def _():
        o_ref[...] = acc_ref[...]


def _rm_none_kernel(x_ref, t_ref, o_ref, *, alpha, gamma):
    focal = _rm_tile_focal(x_ref, t_ref, alpha, gamma)               # (blk, 1)
    # (blk,1)->(1,blk): one XLU relayout per tile (XLU is otherwise idle here);
    # the store itself is lane-dense into the single-row output slab.
    o_ref[...] = focal.reshape(1, -1).astype(o_ref.dtype)


def _cm_none_kernel(x_ref, t_ref, o_ref, *, alpha, gamma):
    focal = _cm_tile_focal(x_ref, t_ref, alpha, gamma)               # (1, blk)
    o_ref[...] = focal.astype(o_ref.dtype)                           # already lane-major


# ---------------------------------------------------------------------------
# Wrapper
# ---------------------------------------------------------------------------

def focal_loss(inputs, targets, *, alpha=1.0, gamma=2.0, reduction="mean",
               max_block_samples=None):
    """Pallas focal loss.

    inputs: [N, C] float logits (any float dtype, kept native in HBM).
    targets: [N] integer class indices.
    reduction: 'mean' | 'sum' | anything else -> per-sample (f32) vector.
    max_block_samples: optional cap on samples per tile (testing / tuning).
    """
    n, c = inputs.shape
    itemsize = jnp.dtype(inputs.dtype).itemsize
    t = targets.astype(jnp.int32)

    lane_major = c <= _LANE_MAJOR_MAX_C
    budget = _vmem_budget_bytes()
    cap = 32768 if lane_major else 4096
    if max_block_samples is not None:
        cap = max(8, min(cap, int(max_block_samples)))
    blk = _samples_per_tile(n, c, itemsize, budget, cap)
    num_tiles = pl.cdiv(n, blk)
    est_vmem = _per_sample_vmem_bytes(c, itemsize) * blk

    # No jnp.pad of the logits: the grid covers ceil(n/blk) tiles; the partial
    # last tile's don't-care samples are removed with a select mask (sum/mean)
    # or the final [:n] slice ('none').

    if lane_major:
        # Samples on the 128-lane axis: one extra HBM pass for the (C, N)
        # relayout, but full lane occupancy for C << 128 and naturally
        # lane-dense (1, blk) per-sample results.
        x = inputs.T                           # (C, N)
        tt = t.reshape(1, n)                   # (1, N) int32 lane row
        in_specs = [pl.BlockSpec((c, blk), lambda i: (0, i)),
                    pl.BlockSpec((1, blk), lambda i: (0, i))]
        sum_kernel = functools.partial(_cm_sum_kernel, alpha=float(alpha),
                                       gamma=float(gamma), n_valid=n, block=blk)
        none_kernel = functools.partial(_cm_none_kernel, alpha=float(alpha),
                                        gamma=float(gamma))
    else:
        x = inputs                             # native dtype, no HBM copy
        tt = t.reshape(n, 1)
        in_specs = [pl.BlockSpec((blk, c), lambda i: (i, 0)),
                    pl.BlockSpec((blk, 1), lambda i: (i, 0))]
        sum_kernel = functools.partial(_rm_sum_kernel, alpha=float(alpha),
                                       gamma=float(gamma), n_valid=n, block=blk)
        none_kernel = functools.partial(_rm_none_kernel, alpha=float(alpha),
                                        gamma=float(gamma))

    if reduction in ("mean", "sum"):
        total = pl.pallas_call(
            sum_kernel,
            out_shape=jax.ShapeDtypeStruct((1, 1), jnp.float32),
            grid_spec=pltpu.PrefetchScalarGridSpec(
                num_scalar_prefetch=0,
                grid=(num_tiles,),
                in_specs=in_specs,
                out_specs=pl.BlockSpec((1, 1), lambda i: (0, 0)),
                scratch_shapes=[pltpu.VMEM((1, 1), jnp.float32)],
            ),
            compiler_params=_compiler_params(("arbitrary",), est_vmem),
        )(x, tt)[0, 0]
        if reduction == "mean":
            return total / jnp.float32(n)
        return total

    # reduction == 'none': lane-dense single-row output slab, sliced to N.
    n_pad = num_tiles * blk
    per_sample = pl.pallas_call(
        none_kernel,
        out_shape=jax.ShapeDtypeStruct((1, n_pad), jnp.float32),
        grid_spec=pltpu.PrefetchScalarGridSpec(
            num_scalar_prefetch=0,
            grid=(num_tiles,),
            in_specs=in_specs,
            out_specs=pl.BlockSpec((1, blk), lambda i: (0, i)),
        ),
        compiler_params=_compiler_params(("parallel",), est_vmem),
    )(x, tt)
    return per_sample.reshape(n_pad)[:n]


# ---------------------------------------------------------------------------
# Reference + self-test
# ---------------------------------------------------------------------------

def _reference_focal_loss(inputs, targets, alpha=1.0, gamma=2.0, reduction="mean"):
    logp = jax.nn.log_softmax(inputs.astype(jnp.float32), axis=-1)
    ce = -jnp.take_along_axis(logp, targets[:, None].astype(jnp.int32), axis=-1)[:, 0]
    pt = jnp.exp(-ce)
    fl = alpha * (1.0 - pt) ** gamma * ce
    if reduction == "mean":
        return fl.mean()
    if reduction == "sum":
        return fl.sum()
    return fl


if __name__ == "__main__":
    key = jax.random.PRNGKey(0)

    def check(n, c, reduction, *, alpha=1.0, gamma=2.0, max_block_samples=None, tag=0):
        k1, k2 = jax.random.split(jax.random.fold_in(key, tag))
        logits = jax.random.normal(k1, (n, c), dtype=jnp.float32)
        targets = jax.random.randint(k2, (n,), 0, c, dtype=jnp.int32)
        out = focal_loss(logits, targets, alpha=alpha, gamma=gamma,
                         reduction=reduction, max_block_samples=max_block_samples)
        out = jax.block_until_ready(out)
        ref = _reference_focal_loss(logits, targets, alpha, gamma, reduction)
        assert jnp.allclose(out, ref, rtol=1e-5, atol=1e-5), (reduction, n, c, out, ref)

    # Small classification head (PhoBERT-style): lane-major path, single tile.
    check(32, 8, "mean", tag=0)
    check(32, 8, "none", tag=1)
    # Multi-tile grid with a partial last tile (cross-tile accumulation + masking).
    check(300, 8, "mean", max_block_samples=128, tag=2)
    check(300, 8, "sum", alpha=0.25, max_block_samples=128, tag=3)
    check(300, 8, "none", max_block_samples=128, tag=4)
    # Wider class count exercises the row-major (classes-on-lanes) path.
    check(48, 160, "mean", tag=5)
    check(48, 160, "none", tag=6)

    print("KERNEL_OK")
</pallas_src>

<mosaic_0001>
module attributes {stable_mosaic.version = 11 : i64} {
  func.func @_cm_sum_kernel(%arg0: i32, %arg1: memref<8x128xf32, #tpu.memory_space<vmem>>, %arg2: memref<1x128xi32, #tpu.memory_space<vmem>>, %arg3: memref<1x1xf32, #tpu.memory_space<vmem>>, %arg4: memref<1x1xf32, #tpu.memory_space<vmem>>) attributes {dimension_semantics = [#tpu.dimension_semantics<arbitrary>], iteration_bounds = array<i64: 1>, scalar_prefetch = 0 : i64, scratch_operands = 1 : i64, tpu.core_type = #tpu.core_type<tc>, window_params = [{transform_indices = @transform_0, window_bounds = array<i64: 8, 128>}, {transform_indices = @transform_1, window_bounds = array<i64: 1, 128>}, {pipeline_mode = #tpu.pipeline_mode<synchronous>, transform_indices = @transform_2, window_bounds = array<i64: 1, 1>}]} {
    %c0_i32 = arith.constant 0 : i32
    %0 = arith.cmpi eq, %arg0, %c0_i32 : i32
    %1 = arith.extui %0 : i1 to i32
    %c0_i32_0 = arith.constant 0 : i32
    %2 = arith.cmpi ne, %1, %c0_i32_0 : i32
    scf.if %2 {
      %cst_20 = arith.constant 0.000000e+00 : f32
      %55 = vector.broadcast %cst_20 : f32 to vector<1x1xf32>
      %c0_21 = arith.constant 0 : index
      %c0_22 = arith.constant 0 : index
      %56 = vector.load %arg4[%c0_21, %c0_22] : memref<1x1xf32, #tpu.memory_space<vmem>>, vector<1x1xf32>
      tpu.vector_store %arg4[%c0_21, %c0_22], %55 {strides = array<i32>} : memref<1x1xf32, #tpu.memory_space<vmem>>, vector<1x1xf32>,
    } else {
    }
    %c0 = arith.constant 0 : index
    %c0_1 = arith.constant 0 : index
    %3 = vector.load %arg1[%c0, %c0_1] : memref<8x128xf32, #tpu.memory_space<vmem>>, vector<8x128xf32>
    %c0_2 = arith.constant 0 : index
    %c0_3 = arith.constant 0 : index
    %4 = vector.load %arg2[%c0_2, %c0_3] : memref<1x128xi32, #tpu.memory_space<vmem>>, vector<1x128xi32>
    %5 = tpu.iota {dimensions = array<i32: 0>} : vector<8x1xi32>
    %cst = arith.constant dense<0xFF800000> : vector<128xf32>
    %6 = vector.multi_reduction <maximumf>, %3, %cst [0] : vector<8x128xf32> to vector<128xf32>
    %7 = vector.shape_cast %6 : vector<128xf32> to vector<1x128xf32>
    %8 = vector.broadcast %7 : vector<1x128xf32> to vector<8x128xf32>
    %9 = arith.subf %3, %8 : vector<8x128xf32>
    %10 = math.exp %9 : vector<8x128xf32>
    %cst_4 = arith.constant dense<0.000000e+00> : vector<128xf32>
    %11 = vector.multi_reduction <add>, %10, %cst_4 [0] : vector<8x128xf32> to vector<128xf32>
    %12 = vector.shape_cast %11 : vector<128xf32> to vector<1x128xf32>
    %13 = math.log %12 : vector<1x128xf32>
    %14 = arith.addf %7, %13 : vector<1x128xf32>
    %15 = vector.broadcast %5 : vector<8x1xi32> to vector<8x128xi32>
    %16 = vector.broadcast %4 : vector<1x128xi32> to vector<8x128xi32>
    %17 = arith.cmpi eq, %15, %16 : vector<8x128xi32>
    %cst_5 = arith.constant 0.000000e+00 : f32
    %18 = vector.broadcast %cst_5 : f32 to vector<8x128xf32>
    %19 = arith.select %17, %3, %18 : vector<8x128xi1>, vector<8x128xf32>
    %cst_6 = arith.constant dense<0.000000e+00> : vector<128xf32>
    %20 = vector.multi_reduction <add>, %19, %cst_6 [0] : vector<8x128xf32> to vector<128xf32>
    %21 = vector.shape_cast %20 : vector<128xf32> to vector<1x128xf32>
    %22 = arith.subf %14, %21 : vector<1x128xf32>
    %cst_7 = arith.constant 0.000000e+00 : f32
    %23 = vector.broadcast %cst_7 : f32 to vector<1x128xf32>
    %24 = arith.maximumf %22, %23 : vector<1x128xf32>
    %cst_8 = arith.constant 0.000000e+00 : f32
    %25 = vector.broadcast %cst_8 : f32 to vector<1x128xf32>
    %26 = arith.subf %25, %24 : vector<1x128xf32>
    %27 = math.exp %26 : vector<1x128xf32>
    %cst_9 = arith.constant 1.000000e+00 : f32
    %28 = vector.broadcast %cst_9 : f32 to vector<1x128xf32>
    %29 = arith.subf %28, %27 : vector<1x128xf32>
    %cst_10 = arith.constant 0.000000e+00 : f32
    %30 = vector.broadcast %cst_10 : f32 to vector<1x128xf32>
    %31 = arith.maximumf %29, %30 : vector<1x128xf32>
    %32 = arith.mulf %31, %31 : vector<1x128xf32>
    %cst_11 = arith.constant 1.000000e+00 : f32
    %33 = vector.broadcast %cst_11 : f32 to vector<1x128xf32>
    %34 = arith.mulf %33, %32 : vector<1x128xf32>
    %35 = arith.mulf %34, %24 : vector<1x128xf32>
    %36 = tpu.iota {dimensions = array<i32: 1>} : vector<1x128xi32>
    %c128_i32 = arith.constant 128 : i32
    %37 = arith.muli %arg0, %c128_i32 : i32
    %38 = vector.broadcast %37 : i32 to vector<1x128xi32>
    %39 = arith.addi %36, %38 : vector<1x128xi32>
    %c32_i32 = arith.constant 32 : i32
    %40 = vector.broadcast %c32_i32 : i32 to vector<1x128xi32>
    %41 = arith.cmpi slt, %39, %40 : vector<1x128xi32>
    %cst_12 = arith.constant 0.000000e+00 : f32
    %42 = vector.broadcast %cst_12 : f32 to vector<1x128xf32>
    %43 = arith.select %41, %35, %42 : vector<1x128xi1>, vector<1x128xf32>
    %c0_13 = arith.constant 0 : index
    %c0_14 = arith.constant 0 : index
    %44 = vector.load %arg4[%c0_13, %c0_14] : memref<1x1xf32, #tpu.memory_space<vmem>>, vector<1x1xf32>
    %45 = vector.shape_cast %43 : vector<1x128xf32> to vector<1x1x128xf32>
    %cst_15 = arith.constant dense<0.000000e+00> : vector<1xf32>
    %46 = vector.multi_reduction <add>, %45, %cst_15 [1, 2] : vector<1x1x128xf32> to vector<1xf32>
    %47 = vector.shape_cast %46 : vector<1xf32> to vector<1x1x1xf32>
    %48 = vector.extract %47[0, 0, 0] : f32 from vector<1x1x1xf32>
    %49 = vector.broadcast %48 : f32 to vector<1x1xf32>
    %50 = arith.addf %44, %49 : vector<1x1xf32>
    %c0_16 = arith.constant 0 : index
    %c0_17 = arith.constant 0 : index
    %51 = vector.load %arg4[%c0_16, %c0_17] : memref<1x1xf32, #tpu.memory_space<vmem>>, vector<1x1xf32>
    tpu.vector_store %arg4[%c0_16, %c0_17], %50 {strides = array<i32>} : memref<1x1xf32, #tpu.memory_space<vmem>>, vector<1x1xf32>,
    %c0_i32_18 = arith.constant 0 : i32
    %52 = arith.cmpi eq, %arg0, %c0_i32_18 : i32
    %53 = arith.extui %52 : i1 to i32
    %c0_i32_19 = arith.constant 0 : i32
    %54 = arith.cmpi ne, %53, %c0_i32_19 : i32
    scf.if %54 {
      %c0_20 = arith.constant 0 : index
      %c0_21 = arith.constant 0 : index
      %55 = vector.load %arg4[%c0_20, %c0_21] : memref<1x1xf32, #tpu.memory_space<vmem>>, vector<1x1xf32>
      %c0_22 = arith.constant 0 : index
      %c0_23 = arith.constant 0 : index
      %56 = vector.load %arg3[%c0_22, %c0_23] : memref<1x1xf32, #tpu.memory_space<vmem>>, vector<1x1xf32>
      tpu.vector_store %arg3[%c0_22, %c0_23], %55 {strides = array<i32>} : memref<1x1xf32, #tpu.memory_space<vmem>>, vector<1x1xf32>,
    } else {
    }
    return
  }
  func.func @transform_0(%arg0: i32) -> (i32, i32) {
    %c0_i32 = arith.constant 0 : i32
    %c0_i32_0 = arith.constant 0 : i32
    return %c0_i32, %arg0 : i32, i32
  }
  func.func @transform_1(%arg0: i32) -> (i32, i32) {
    %c0_i32 = arith.constant 0 : i32
    %c0_i32_0 = arith.constant 0 : i32
    return %c0_i32, %arg0 : i32, i32
  }
  func.func @transform_2(%arg0: i32) -> (i32, i32) {
    %c0_i32 = arith.constant 0 : i32
    %c0_i32_0 = arith.constant 0 : i32
    %c0_i32_1 = arith.constant 0 : i32
    return %c0_i32, %c0_i32_0 : i32, i32
  }
}

</mosaic_0001>

<llo_original>
// kernel: tpu_custom_call.1
$region0: #{tpu_custom_call.1}
  #allocation0 [shape = 'u32[]', space=smem, size = 0x4, offset = 0x4, fixed_abs, tag = 'smem constant byte address 0x4 - core index']
  #allocation1 [shape = 'u32[144,128]{1,0:T(1,128)}', space=vmem, size = 0x12000, scoped, tag = 'internal scratch']
  #allocation2 [shape = 'f32[1,1]{1,0:T(1,128)}', space=vmem, size = 0x200, scoped, tag = 'scratch operand']
  %s0 = inlined_call_operand.hbm [shape: f32[8,32], index: 0, kind: input, shape index: {}]
  %s1 = inlined_call_operand.vmem [shape: s32[1,32], index: 1, kind: input, shape index: {}]
  %s2 = inlined_call_operand.hbm [shape: f32[1,1], index: 2, kind: output, shape index: {}]
  %s3 = sld [smem:[#allocation0]]
  $region30: #{tpu_custom_call.1} parent=0
    _
  %s5 = ssub.s32 1, %s3
  %s6 = scalar_select 0, %s5, %s3
  $region1: #{tpu_custom_call.1} parent=0
    #allocation3 [shape = 'u8[4096]{0}', space=vmem, size = 0x1000, scoped, tag = 'input window, operand 0, single buffered']
    #allocation4 [shape = 's32[1]{0}', space=sflag, size = 0x4, scoped, tag = 'scoped memory for tpu_custom_call.1']
    #allocation5 [shape = 's32[1]{0}', space=sflag, size = 0x4, scoped, tag = 'scoped memory for tpu_custom_call.1']
    #allocation6 [shape = 'u8[512]{0}', space=vmem, size = 0x400, scoped, tag = 'output window, operand 0, single buffered']
    %7 = vsyncpa [#allocation4], 0
    %8 = vsyncpa [#allocation5], 0
    // Predicated region
    $region2: #{tpu_custom_call.1} parent=1 // pred_check
      _
    $region3: #{tpu_custom_call.1} parent=1 // pred_check_branch
      %10 = sbr.rel (0) target = $region5
    $region4: #{tpu_custom_call.1} parent=1 // pred_region
      %s12 = ssub.s32 128, 128
      %13 = vsyncadd [#allocation4], %s12
      %s15 = sshll.u32 [#allocation3], 4
      %s16 = int_to_ptr.vmem [resolvable:$true] %s15
      %18 = dma.hbm_to_vmem [thread:$0]  %s0, 128, %s16, [#allocation4]
    $region5: #{tpu_custom_call.1} parent=1 // pred_fallthru
      _
    // Predicated region
    $region6: #{tpu_custom_call.1} parent=1 // pred_check
      _
    $region7: #{tpu_custom_call.1} parent=1 // pred_check_branch
      %20 = sbr.rel (0) target = $region9
    $region8: #{tpu_custom_call.1} parent=1 // pred_region
      _
    $region9: #{tpu_custom_call.1} parent=1 // pred_fallthru
      _
    // Predicated region
    $region10: #{tpu_custom_call.1} parent=1 // pred_check
      _
    $region11: #{tpu_custom_call.1} parent=1 // pred_check_branch
      %22 = sbr.rel (0) target = $region13
    $region12: #{tpu_custom_call.1} parent=1 // pred_region
      %23 = dma.done [#allocation4], 128
    $region13: #{tpu_custom_call.1} parent=1 // pred_fallthru
      _
    %p24 = scmp.eq.s32.totalorder 0, 0
    // Predicated region
    $region14: #{tpu_custom_call.1} parent=1 // pred_check
      %p25 = pneg %p24
    $region15: #{tpu_custom_call.1} parent=1 // pred_check_branch
      %27 = sbr.rel (%p25) target = $region17
    $region16: #{tpu_custom_call.1} parent=1 // pred_region
      %vm28 = vcmask 0
      %29 = vst.msk [vmem:[#allocation2] sm:$0x1] %vm28, 0.0
    $region17: #{tpu_custom_call.1} parent=1 // pred_fallthru
      _
    %v30 = vld [vmem:[#allocation3] sm:$0xff]
    %v31 = vld [vmem:[%s1] sm:$0x1]
    %v32 = vlaneseq
    %v33 = vshrl.u32 %v32, 7
    %v34 = vrot.slane %v30, 4
    %v35 = vmax.f32 %v30, %v34
    %v36 = vrot.slane %v35, 2
    %v37 = vmax.f32 %v35, %v36
    %v38 = vrot.slane %v37, 1
    %v39 = vmax.f32 %v37, %v38
    %v40 = vsub.f32 %v30, %v39
    %v41 = vmul.f32 %v40, 1.442695
    %v42 = vpow.pop %v41
    %v43 = vrot.slane %v42, 4
    %v44 = vadd.f32 %v42, %v43
    %v45 = vrot.slane %v44, 2
    %v46 = vadd.f32 %v44, %v45
    %v47 = vrot.slane %v46, 1
    %v48 = vadd.f32 %v46, %v47
    %v49 = vlog2.pop %v48
    %v50 = vmul.f32 %v49, 0.6931472
    %v51 = vadd.f32 %v39, %v50
    %v52 = vlaneseq
    %v53 = vshrl.u32 %v52, 7
    %v54 = vsub.s32 0, %v53
    %v55 = vrot.slane %v31, %v54
    %vm56 = vcmp.eq.s32.totalorder %v33, %v55
    %v57 = vsel %vm56, %v30, 0.0
    %v58 = vrot.slane %v57, 4
    %v59 = vadd.f32 %v57, %v58
    %v60 = vrot.slane %v59, 2
    %v61 = vadd.f32 %v59, %v60
    %v62 = vrot.slane %v61, 1
    %v63 = vadd.f32 %v61, %v62
    %v64 = vsub.f32 %v51, %v63
    %v65 = vmax.f32 %v64, 0.0
    %v66 = vsub.f32 0.0, %v65
    %v67 = vmul.f32 %v66, 1.442695
    %v68 = vpow.pop %v67
    %v69 = vsub.f32 1.0, %v68
    %v70 = vmax.f32 %v69, 0.0
    %v71 = vmul.f32 %v70, %v70
    %v72 = vmul.f32 %v71, %v65
    %v73 = vlaneseq
    %v74 = vand.u32 %v73, 127
    %s75 = smul.u32 0, 128
    %v76 = vstv %s75
    %v77 = vadd.s32 %v74, %v76
    %vm78 = vcmp.lt.s32.totalorder %v77, 32
    %v79 = vsel %vm78, %v72, 0.0
    %v80 = vld [vmem:[#allocation2] sm:$0x1]
    %vm81 = vcmask 1040384
    %v82 = vsel %vm81, %v79, 0.0
    %83 = vadd.xlane.f32.xlu0 %v82
    %v84 = vpop.xlane.xlu0 %83
    %v85 = vrot.slane %v84, 4
    %v86 = vadd.f32 %v84, %v85
    %v87 = vrot.slane %v86, 2
    %v88 = vadd.f32 %v86, %v87
    %v89 = vrot.slane %v88, 1
    %v90 = vadd.f32 %v88, %v89
    %s91 = vtos %v90
    %v92 = vstv %s91
    %v93 = vadd.f32 %v80, %v92
    %vm94 = vcmask 0
    %95 = vst.msk [vmem:[#allocation2] sm:$0x1] %vm94, %v93
    // Predicated region
    $region18: #{tpu_custom_call.1} parent=1 // pred_check
      %p96 = pneg %p24
    $region19: #{tpu_custom_call.1} parent=1 // pred_check_branch
      %98 = sbr.rel (%p96) target = $region21
    $region20: #{tpu_custom_call.1} parent=1 // pred_region
      %v99 = vld [vmem:[#allocation2] sm:$0x1]
      %100 = vst.msk [vmem:[#allocation6] sm:$0x1] %vm94, %v99
    $region21: #{tpu_custom_call.1} parent=1 // pred_fallthru
      _
    // Predicated region
    $region22: #{tpu_custom_call.1} parent=1 // pred_check
      _
    $region23: #{tpu_custom_call.1} parent=1 // pred_check_branch
      %102 = sbr.rel (0) target = $region25
    $region24: #{tpu_custom_call.1} parent=1 // pred_region
      %s104 = ssub.s32 16, 16
      %105 = vsyncadd [#allocation5], %s104
      %s107 = sshll.u32 [#allocation6], 4
      %s108 = int_to_ptr.vmem [resolvable:$true] %s107
      %110 = dma.vmem_to_hbm [thread:$0]  %s108, 16, %s2, [#allocation5]
    $region25: #{tpu_custom_call.1} parent=1 // pred_fallthru
      _
    // Predicated region
    $region26: #{tpu_custom_call.1} parent=1 // pred_check
      _
    $region27: #{tpu_custom_call.1} parent=1 // pred_check_branch
      %112 = sbr.rel (0) target = $region29
    $region28: #{tpu_custom_call.1} parent=1 // pred_region
      %113 = dma.done [#allocation5], 16
    $region29: #{tpu_custom_call.1} parent=1 // pred_fallthru
      _
    %114 = vsyncpa [#allocation4], 1
    %115 = vsyncpa [#allocation5], 1

</llo_original>
